<compile_context>
chip_gen: v7x
topology: tpu7x:2x2x1
jax: 0.10.0
libtpu: 0.0.40
codegen_flags: <defaults>
</compile_context>

<pallas_src>
import heapq
import numpy as np

import jax
import jax.numpy as jnp
from jax import lax
from jax.experimental import pallas as pl
from jax.experimental.pallas import tpu as pltpu


def _round_up(x, m):
    return ((x + m - 1) // m) * m


# Scoped-VMEM budget: all tiles below are sized so double-buffered streams plus the
# in-kernel (tn, tk) membership intermediates stay well under 32 MiB on every
# generation (v5e/v6e 128 MiB phys, v7x 64 MiB phys).
_VMEM_LIMIT_BYTES = 32 * 1024 * 1024

# Kernel 1 (squared magnitude): face tile sized for ~4 MiB blocks, capped at 32K lanes.
_TF_MAX = 32768
_K1_BLOCK_BYTES = 4 * 1024 * 1024

# Kernel 2 (group rebuild): moderate tiles — the HBM streams are tiny now, so tile
# size only amortises per-step overhead vs. the VMEM cost of the in-kernel
# (tn, tk) iota/one-hot intermediates (~6 MiB at 512 x 2048).
_TN_MAX = 512
_TK_MAX = 2048
_K2_FE_BLOCK_BYTES = 4 * 1024 * 1024


# ----------------------------------------------------------------------------
# Kernel 1: per-face squared feature magnitude (reduction over channel axis)
# ----------------------------------------------------------------------------
def _sqmag_kernel(fe_ref, out_ref):
    x = fe_ref[0].astype(jnp.float32)                       # (Cp, tf), f32 accumulation
    out_ref[0] = jnp.sum(x * x, axis=0, keepdims=True)      # (1, tf)


def squared_magnitude(fe_p, *, tf):
    """fe_p: (B, Cp, Fp) padded features -> (B, 1, Fp) f32 sum_c fe^2 (tiled over F)."""
    B, Cp, Fp = fe_p.shape
    return pl.pallas_call(
        _sqmag_kernel,
        out_shape=jax.ShapeDtypeStruct((B, 1, Fp), jnp.float32),
        grid_spec=pltpu.PrefetchScalarGridSpec(
            num_scalar_prefetch=0,
            grid=(B, Fp // tf),
            in_specs=[pl.BlockSpec((1, Cp, tf), lambda b, f: (b, 0, f))],
            out_specs=pl.BlockSpec((1, 1, tf), lambda b, f: (b, 0, f)),
        ),
        compiler_params=pltpu.CompilerParams(
            dimension_semantics=("parallel", "parallel"),
            vmem_limit_bytes=_VMEM_LIMIT_BYTES,
        ),
    )(fe_p)


# ----------------------------------------------------------------------------
# Kernel 2: rebuild_features via per-face group ids (segment-mean as a matmul
# against an on-the-fly one-hot tile; no dense (T, F) matrix ever hits HBM)
#   pooled[c, t] = (sum_{f : gid[f]==t} fe[c, f]) * inv_count[t]
# ----------------------------------------------------------------------------
def _rebuild_kernel(fe_ref, gid_ref, inv_ref, out_ref):
    j = pl.program_id(1)
    k = pl.program_id(2)

    # Output block index ignores k -> the block stays VMEM-resident across the
    # whole reduction axis; accumulate straight into it (no scratch accumulator).
    @pl.when(k == 0)
    def _init():
        out_ref[0] = jnp.zeros_like(out_ref[0])

    tn = out_ref.shape[2]          # output-group tile
    tk = fe_ref.shape[2]           # face (reduction) tile

    # Build the 0/1 membership tile in VMEM from the per-face group ids.
    # Padded faces carry gid = -1 and match no row; padded output rows (>= T)
    # are never matched by any gid, so they stay zero.
    rows = lax.broadcasted_iota(jnp.int32, (tn, tk), 0) + j * tn          # (tn, tk)
    onehot = jnp.where(rows == gid_ref[0], jnp.bfloat16(1.0), jnp.bfloat16(0.0))

    # bf16 x bf16 -> f32 accumulation: native MXU fast path on v5e/v6e/v7x.
    out_ref[0] += lax.dot_general(
        fe_ref[0], onehot,
        dimension_numbers=(((1,), (1,)), ((), ())),   # contract face axis of both
        preferred_element_type=jnp.float32,
    )

    @pl.when(k == pl.num_programs(2) - 1)
    def _finalize():
        # inv_ref[0] is (1, tn): one broadcast multiply replaces a per-group divide.
        out_ref[0] = out_ref[0] * inv_ref[0]


def rebuild_features(fe_bf16, gid, inv_counts, *, tn, tk):
    """fe_bf16: (B, Cp, Fp) bf16, gid: (B, 1, Fp) int32, inv_counts: (B, 1, Tp) f32
    -> pooled (B, Cp, Tp) f32."""
    B, Cp, Fp = fe_bf16.shape
    Tp = inv_counts.shape[2]
    return pl.pallas_call(
        _rebuild_kernel,
        out_shape=jax.ShapeDtypeStruct((B, Cp, Tp), jnp.float32),
        grid_spec=pltpu.PrefetchScalarGridSpec(
            num_scalar_prefetch=0,
            grid=(B, Tp // tn, Fp // tk),
            in_specs=[
                pl.BlockSpec((1, Cp, tk), lambda b, j, k: (b, 0, k)),   # fe (bf16)
                pl.BlockSpec((1, 1, tk), lambda b, j, k: (b, 0, k)),    # group ids (int32)
                pl.BlockSpec((1, 1, tn), lambda b, j, k: (b, 0, j)),    # 1/|group|
            ],
            out_specs=pl.BlockSpec((1, Cp, tn), lambda b, j, k: (b, 0, j)),
        ),
        compiler_params=pltpu.CompilerParams(
            # NOTE(v7x megacore): parallel slices = B * (Tp//tn); with B >= 2 both
            # TensorCores get work even when Tp == tn.
            dimension_semantics=("parallel", "parallel", "arbitrary"),
            vmem_limit_bytes=_VMEM_LIMIT_BYTES,
        ),
    )(fe_bf16, gid, inv_counts)


# ----------------------------------------------------------------------------
# Host-side glue reproducing the forward() structure of MeshPoolFace
# ----------------------------------------------------------------------------
class SimpleMesh:
    """Minimal synthetic stand-in for the MeshCNN mesh (only what pooling reads)."""

    def __init__(self, face_count, gemm_faces):
        self.face_count = face_count
        self.gemm_faces = gemm_faces  # (F, 3) int — face adjacency


class MeshPoolFaceJAX:
    def __init__(self, target, multi_thread=False):
        self._out_target = target

    def __call__(self, fe, meshes):
        return self.forward(fe, meshes)

    def forward(self, fe, meshes):
        fe = jnp.asarray(fe)
        B, C, F = fe.shape
        T = self._out_target

        # ---- tile / padding choices (lane-dense, multiples of (8, 128)) -----
        Cp = _round_up(C, 16)                                  # valid sublane count for f32 & bf16
        itemsize = jnp.dtype(fe.dtype).itemsize

        # kernel 1: fat face tiles, capped by a per-block VMEM budget
        lane_budget = max(128, (_K1_BLOCK_BYTES // (Cp * itemsize)) // 128 * 128)
        tf = min(_round_up(F, 128), _TF_MAX, lane_budget)
        Fp1 = _round_up(F, tf)

        # kernel 2: face (reduction) and group (output lane) tiles
        tk = min(_round_up(F, 128), _TK_MAX)
        tk = max(128, min(tk, (_K2_FE_BLOCK_BYTES // (Cp * 2)) // 128 * 128))
        tn = min(_round_up(T, 128), _TN_MAX)
        Fp2 = _round_up(F, tk)
        Tp = _round_up(T, tn)

        # zero-pad features (zeros do not affect the squared-magnitude sum, and
        # padded faces carry gid=-1 so they never contribute to any group).
        fe_p1 = jnp.pad(fe, ((0, 0), (0, Cp - C), (0, Fp1 - F)))            # original dtype
        fe_p2 = jnp.pad(fe, ((0, 0), (0, Cp - C), (0, Fp2 - F)))
        # bf16 MXU operands (f32 accumulation in-kernel).  Precision note: if fe
        # arrives as f32 its matmul inputs are rounded to bf16 here.
        fe_bf16 = fe_p2.astype(jnp.bfloat16)

        # Pallas kernel 1: priorities for the heap (sum of squares over channels).
        sqmag = np.asarray(squared_magnitude(fe_p1, tf=tf))[:, 0, :]         # (B, Fp1)

        gid_list = []
        inv_list = []
        for mi, mesh in enumerate(meshes):
            gid_np = np.full((Fp2,), -1, np.int32)
            cnt = np.zeros((Tp,), np.float32)
            fc = int(mesh.face_count)

            if fc <= T:
                # original: fe[:, :target]  ==  identity groups over the first target faces
                n = min(T, F, fc) if fc > 0 else 0
                n = min(T, F)
                gid_np[:n] = np.arange(n, dtype=np.int32)
                cnt[:n] = 1.0
                gid_list.append(gid_np)
                inv_list.append(1.0 / np.maximum(cnt, 1.0))
                continue

            # --- __build_queue (same structure as the torch module) ---
            sq = sqmag[mi]
            heap = []
            pairs_in_heap = set()
            for i in range(fc):
                for n in list(mesh.gemm_faces[i]):
                    n = int(n)
                    if (i, n) not in pairs_in_heap:
                        heap.append([float(sq[i] + sq[n]), i, n])
                        pairs_in_heap.add((i, n))
                        pairs_in_heap.add((n, i))
            heapq.heapify(heap)

            # --- greedy pooling loop (simplified) ---
            # TODO(synk): the full edge-collapse surgery (edge masks, gemm_edges/sides
            # rewiring, vertex merges, triplet cleanup) is sequential pointer-chasing on
            # mesh connectivity with no Pallas equivalent; only the priority-queue face
            # merging and union-find group bookkeeping are reproduced here.
            face_mask = np.ones(fc, dtype=bool)
            parent = np.arange(fc, dtype=np.int64)   # union-find: root == surviving group rep
            remaining = fc
            while remaining > T and heap:
                _, face_id, n_id = heapq.heappop(heap)
                face_id, n_id = int(face_id), int(n_id)
                if face_mask[face_id] and face_mask[n_id] and face_id != n_id:
                    parent[n_id] = face_id          # union(n_id -> face_id)
                    face_mask[n_id] = False         # remove_group(n_id)
                    remaining -= 1

            surv = np.where(face_mask)[0]
            if len(surv) > T:
                # mirrors the reference's "Run out of faces to pool" condition
                print('Run out of faces to pool')
            surv = surv[:T]
            slot_of = {int(f): i for i, f in enumerate(surv)}

            def find(x):
                root = x
                while parent[root] != root:
                    root = parent[root]
                while parent[x] != root:                 # path compression
                    parent[x], x = root, parent[x]
                return root

            for f in range(fc):
                gid_np[f] = slot_of.get(int(find(f)), -1)

            valid = gid_np[:fc]
            valid = valid[valid >= 0]
            cnt[:] = np.bincount(valid, minlength=Tp)[:Tp].astype(np.float32)

            gid_list.append(gid_np)
            inv_list.append(1.0 / np.maximum(cnt, 1.0))

        gid_arr = jnp.asarray(np.stack(gid_list, axis=0)[:, None, :], dtype=jnp.int32)    # (B, 1, Fp2)
        inv_arr = jnp.asarray(np.stack(inv_list, axis=0)[:, None, :], dtype=jnp.float32)  # (B, 1, Tp)

        # Pallas kernel 2: averaged feature rebuild per surviving face group.
        # TODO(synk): a sorted-face + scalar-prefetched-offsets segment-sum kernel would
        # also remove the O(T*F) on-chip one-hot/matmul work; left for a follow-up.
        pooled = rebuild_features(fe_bf16, gid_arr, inv_arr, tn=tn, tk=tk)   # (B, Cp, Tp) f32
        pooled = pooled[:, :C, :T].astype(fe.dtype)
        # matches torch.cat(updated_fe).view(len(meshes), -1, target)
        return pooled.reshape(B, -1, T)


# ----------------------------------------------------------------------------
if __name__ == "__main__":
    key = jax.random.PRNGKey(0)
    B, C, F, target = 2, 4, 16, 8

    fe = jax.random.normal(key, (B, C, F), dtype=jnp.float32)

    # deterministic synthetic triangular-mesh face adjacency (3 neighbors per face)
    base = np.arange(F)
    gemm_faces = np.stack([(base + 1) % F, (base + 2) % F, (base + 3) % F], axis=1).astype(np.int32)
    meshes = [SimpleMesh(F, gemm_faces.copy()) for _ in range(B)]

    pool = MeshPoolFaceJAX(target)
    out = pool(fe, meshes)
    out = jax.block_until_ready(out)

    assert out.shape == (B, C, target), out.shape
    assert jnp.all(jnp.isfinite(out))
    print("KERNEL_OK")
</pallas_src>

<mosaic_0001>
module attributes {stable_mosaic.version = 11 : i64} {
  func.func @_sqmag_kernel(%arg0: i32, %arg1: i32, %arg2: memref<1x16x128xf32, #tpu.memory_space<vmem>>, %arg3: memref<1x1x128xf32, #tpu.memory_space<vmem>>) attributes {dimension_semantics = [#tpu.dimension_semantics<parallel>, #tpu.dimension_semantics<parallel>], iteration_bounds = array<i64: 2, 1>, scalar_prefetch = 0 : i64, scratch_operands = 0 : i64, tpu.core_type = #tpu.core_type<tc>, window_params = [{transform_indices = @transform_0, window_bounds = array<i64: 1, 16, 128>}, {transform_indices = @transform_1, window_bounds = array<i64: 1, 1, 128>}]} {
    %c0 = arith.constant 0 : index
    %c0_0 = arith.constant 0 : index
    %c0_1 = arith.constant 0 : index
    %0 = vector.load %arg2[%c0, %c0_0, %c0_1] : memref<1x16x128xf32, #tpu.memory_space<vmem>>, vector<1x16x128xf32>
    %1 = vector.shape_cast %0 : vector<1x16x128xf32> to vector<16x128xf32>
    %2 = arith.mulf %1, %1 : vector<16x128xf32>
    %cst = arith.constant dense<0.000000e+00> : vector<128xf32>
    %3 = vector.multi_reduction <add>, %2, %cst [0] : vector<16x128xf32> to vector<128xf32>
    %4 = vector.shape_cast %3 : vector<128xf32> to vector<1x128xf32>
    %c0_2 = arith.constant 0 : index
    %c0_3 = arith.constant 0 : index
    %c0_4 = arith.constant 0 : index
    %5 = vector.load %arg3[%c0_2, %c0_3, %c0_4] : memref<1x1x128xf32, #tpu.memory_space<vmem>>, vector<1x1x128xf32>
    %6 = vector.shape_cast %5 : vector<1x1x128xf32> to vector<1x128xf32>
    %7 = vector.shape_cast %4 : vector<1x128xf32> to vector<1x1x128xf32>
    tpu.vector_store %arg3[%c0_2, %c0_3, %c0_4], %7 {strides = array<i32>} : memref<1x1x128xf32, #tpu.memory_space<vmem>>, vector<1x1x128xf32>,
    return
  }
  func.func @transform_0(%arg0: i32, %arg1: i32) -> (i32, i32, i32) {
    %c0_i32 = arith.constant 0 : i32
    %c0_i32_0 = arith.constant 0 : i32
    return %arg0, %c0_i32, %arg1 : i32, i32, i32
  }
  func.func @transform_1(%arg0: i32, %arg1: i32) -> (i32, i32, i32) {
    %c0_i32 = arith.constant 0 : i32
    %c0_i32_0 = arith.constant 0 : i32
    return %arg0, %c0_i32, %arg1 : i32, i32, i32
  }
}

</mosaic_0001>

<llo_original>
// kernel: tpu_custom_call.1
$region0: #{tpu_custom_call.1}
  #allocation0 [shape = 'u32[]', space=smem, size = 0x4, offset = 0x4, fixed_abs, tag = 'smem constant byte address 0x4 - core index']
  #allocation1 [shape = 'u32[144,128]{1,0:T(1,128)}', space=vmem, size = 0x12000, scoped, tag = 'internal scratch']
  %s0 = inlined_call_operand.hbm [shape: f32[2,16,128], index: 0, kind: input, shape index: {}]
  %s1 = inlined_call_operand.hbm [shape: f32[2,1,128], index: 1, kind: output, shape index: {}]
  %s2 = sld [smem:[#allocation0]]
  $region41: #{tpu_custom_call.1} parent=0
    _
  %s4 = ssub.s32 1, %s2
  %s5 = scalar_select 0, %s4, %s2
  $region1: #{tpu_custom_call.1} parent=0
    #allocation2 [shape = 'u8[16384]{0}', space=vmem, size = 0x4000, scoped, tag = 'input window, operand 0']
    #allocation3 [shape = 's32[2]{0}', space=sflag, size = 0x8, scoped, tag = 'scoped memory for tpu_custom_call.1']
    #allocation4 [shape = 's32[2]{0}', space=sflag, size = 0x8, scoped, tag = 'scoped memory for tpu_custom_call.1']
    #allocation5 [shape = 'u8[1024]{0}', space=vmem, size = 0x400, scoped, tag = 'output window, operand 0']
    %6 = vsyncpa [#allocation3], 0
    %s7 = scalar_lea.sflag [#allocation3], 1
    %8 = vsyncpa %s7, 0
    %9 = vsyncpa [#allocation4], 0
    %s10 = scalar_lea.sflag [#allocation4], 1
    %11 = vsyncpa %s10, 0
    loop: start=0, step=1, limit=4
    $region2: #{tpu_custom_call.1} parent=1 // loop_pre_header
      _
    $region3: #{tpu_custom_call.1} parent=1 // loop_header
      %s13 = sphi 0, %s17
      %p14 = scmp.ge.s32.totalorder %s13, 4
      %s20 = sphi 0, %s32
      %s21 = sphi 0, %s28
      %s22 = sphi 0, %s20
      %s23 = sphi 0, %s21
      %s24 = sphi 0, %s22
      %s25 = sphi 0, %s23
      %s37 = sphi 0, %s39
      %s40 = sphi 0, %s37
      %s41 = sphi 0, %s40
      %s57 = sphi 0, %s41
      %s65 = sphi 0, %s67
      %s68 = sphi 0, %s65
      %s69 = sphi 0, %s68
      %s85 = sphi 0, %s69
    $region4: #{tpu_custom_call.1} parent=1 // loop_header_branch
      %16 = sbr.rel (%p14) target = $region8
    $region5: #{tpu_custom_call.1} parent=1 // loop_body
      %s18 = ssub.s32 %s13, 1
      %s19 = ssub.s32 %s13, 2
      %s26 = sadd.s32 1, %s21
      %p27 = scmp.ge.s32.totalorder %s26, 1
      %s28 = scalar_select %p27, 0, %s26
      %s29 = sadd.s32 1, %s20
      %s30 = scalar_select %p27, %s29, %s20
      %p31 = scmp.ge.s32.totalorder %s30, 2
      %s32 = scalar_select %p31, 0, %s30
      %s33 = ssub.s32 %s20, %s32
      %s34 = ssub.s32 %s21, %s28
      %s35 = sor.u32 %s33, %s34
      %p36 = scmp.eq.s32.totalorder %s35, 0
      %s38 = sadd.s32 %s37, 1
      %s39 = scalar_select %p36, %s37, %s38
      %p42 = pneg %p36
      %p43 = scmp.eq.s32.totalorder %s13, 1
      %p44 = por %p42, %p43
      %p45 = scmp.ne.s32.totalorder %s37, %s40
      %p46 = scmp.eq.s32.totalorder %s13, 0
      %p47 = por %p45, %p46
      %p48 = scmp.ne.s32.totalorder %s37, %s40
      %p49 = scmp.eq.s32.totalorder %s18, 1
      %p50 = por %p48, %p49
      %p51 = scmp.ne.s32.totalorder %s40, %s41
      %p52 = scmp.eq.s32.totalorder %s18, 0
      %p53 = por %p51, %p52
      %p54 = scmp.ne.s32.totalorder %s40, %s41
      %p55 = scmp.eq.s32.totalorder %s19, 1
      %p56 = por %p54, %p55
      %p58 = scmp.ne.s32.totalorder %s41, %s57
      %p59 = scmp.eq.s32.totalorder %s19, 0
      %p60 = por %p58, %p59
      %s61 = ssub.s32 %s20, %s32
      %s62 = ssub.s32 %s21, %s28
      %s63 = sor.u32 %s61, %s62
      %p64 = scmp.eq.s32.totalorder %s63, 0
      %s66 = sadd.s32 %s65, 1
      %s67 = scalar_select %p64, %s65, %s66
      %p70 = pneg %p64
      %p71 = scmp.eq.s32.totalorder %s13, 1
      %p72 = por %p70, %p71
      %p73 = scmp.ne.s32.totalorder %s65, %s68
      %p74 = scmp.eq.s32.totalorder %s13, 0
      %p75 = por %p73, %p74
      %p76 = scmp.ne.s32.totalorder %s65, %s68
      %p77 = scmp.eq.s32.totalorder %s18, 1
      %p78 = por %p76, %p77
      %p79 = scmp.ne.s32.totalorder %s68, %s69
      %p80 = scmp.eq.s32.totalorder %s18, 0
      %p81 = por %p79, %p80
      %p82 = scmp.ne.s32.totalorder %s68, %s69
      %p83 = scmp.eq.s32.totalorder %s19, 1
      %p84 = por %p82, %p83
      %p86 = scmp.ne.s32.totalorder %s69, %s85
      %p87 = scmp.eq.s32.totalorder %s19, 0
      %p88 = por %p86, %p87
      %p89 = scmp.le.s32.totalorder 1, %s13
      %p90 = scmp.lt.s32.totalorder %s13, 3
      %p91 = pnand %p89, %p90
      %p92 = pneg %p91
      // Predicated region
      $region9: #{tpu_custom_call.1} parent=5 // pred_check
        _
      $region10: #{tpu_custom_call.1} parent=5 // pred_check_branch
        %94 = sbr.rel (%p91) target = $region12
      $region11: #{tpu_custom_call.1} parent=5 // pred_region
        %s95 = ssub.s32 %s13, 1
      $region12: #{tpu_custom_call.1} parent=5 // pred_fallthru
        _
      %p96 = scmp.lt.s32.totalorder %s13, 2
      // Predicated region
      $region13: #{tpu_custom_call.1} parent=5 // pred_check
        %p97 = pneg %p96
      $region14: #{tpu_custom_call.1} parent=5 // pred_check_branch
        %99 = sbr.rel (%p97) target = $region16
      $region15: #{tpu_custom_call.1} parent=5 // pred_region
        // Predicated region
        $region17: #{tpu_custom_call.1} parent=15 // pred_check
          %p100 = pneg %p47
        $region18: #{tpu_custom_call.1} parent=15 // pred_check_branch
          %102 = sbr.rel (%p100) target = $region20
        $region19: #{tpu_custom_call.1} parent=15 // pred_region
          %s103 = sand.u32 %s37, 1
          %s104 = scalar_lea.sflag [#allocation3], %s103
          %s105 = sand.u32 %s37, 1
          %s106 = smul.addr %s105, 16
          %s107 = scalar_lea.vmem [#allocation2], %s106
          %s109 = ssub.s32 256, 256
          %110 = vsyncadd %s104, %s109
          %s111 = smul.addr %s20, 2
          %s112 = sadd.s32 %s21, %s111
          %s113 = smul.addr %s112, 128
          %s114 = scalar_lea.hbm %s0, %s113
          %s115 = sshll.u32 %s107, 4
          %s116 = int_to_ptr.vmem [resolvable:$true] %s115
          %121 = dma.hbm_to_vmem [thread:$0]  %s114, 256, %s116, %s104, 128, 128, 8
        $region20: #{tpu_custom_call.1} parent=15 // pred_fallthru
          _
      $region16: #{tpu_custom_call.1} parent=5 // pred_fallthru
        _
      %p122 = scmp.le.s32.totalorder 1, %s13
      %p123 = scmp.lt.s32.totalorder %s13, 3
      %p124 = pnand %p122, %p123
      %p125 = pneg %p124
      // Predicated region
      $region21: #{tpu_custom_call.1} parent=5 // pred_check
        _
      $region22: #{tpu_custom_call.1} parent=5 // pred_check_branch
        %127 = sbr.rel (%p124) target = $region24
      $region23: #{tpu_custom_call.1} parent=5 // pred_region
        %s128 = ssub.s32 %s13, 1
        %s129 = sand.u32 %s40, 1
        %s130 = scalar_lea.sflag [#allocation3], %s129
        %s131 = sand.u32 %s40, 1
        %s132 = smul.addr %s131, 16
        %s133 = scalar_lea.vmem [#allocation2], %s132
        // Predicated region
        $region25: #{tpu_custom_call.1} parent=23 // pred_check
          %p134 = pneg %p53
        $region26: #{tpu_custom_call.1} parent=23 // pred_check_branch
          %136 = sbr.rel (%p134) target = $region28
        $region27: #{tpu_custom_call.1} parent=23 // pred_region
          %137 = dma.done %s130, 256
        $region28: #{tpu_custom_call.1} parent=23 // pred_fallthru
          _
        %s138 = sand.u32 %s40, 1
        %s139 = scalar_lea.sflag [#allocation3], %s138
        %s140 = sand.u32 %s40, 1
        %s141 = smul.addr %s140, 16
        %s142 = scalar_lea.vmem [#allocation2], %s141
        %p143 = pneg %p53
        %p144 = pneg %p50
        %p145 = pneg %p81
        %p146 = pneg %p78
        %s147 = sand.u32 %s68, 1
        %s148 = scalar_lea.sflag [#allocation4], %s147
        %s149 = sand.u32 %s68, 1
        %s150 = scalar_lea.vmem [#allocation5], %s149
        %v151 = vld [vmem:[%s133] sm:$0xff]
        %v152 = vld [vmem:[%s133 + $0x8] sm:$0xff]
        %v153 = vmul.f32 %v151, %v151
        %v154 = vmul.f32 %v152, %v152
        %v155 = vadd.f32 %v153, %v154
        %v156 = vrot.slane %v155, 4
        %v157 = vadd.f32 %v155, %v156
        %v158 = vrot.slane %v157, 2
        %v159 = vadd.f32 %v157, %v158
        %v160 = vrot.slane %v159, 1
        %v161 = vadd.f32 %v159, %v160
        %162 = vst [vmem:[%s150] sm:$0x1] %v161
        %s163 = sand.u32 %s68, 1
        %s164 = scalar_lea.sflag [#allocation4], %s163
        %s165 = sand.u32 %s68, 1
        %s166 = scalar_lea.vmem [#allocation5], %s165
        // Predicated region
        $region29: #{tpu_custom_call.1} parent=23 // pred_check
          %p167 = pneg %p78
        $region30: #{tpu_custom_call.1} parent=23 // pred_check_branch
          %169 = sbr.rel (%p167) target = $region32
        $region31: #{tpu_custom_call.1} parent=23 // pred_region
          %s171 = ssub.s32 16, 16
          %172 = vsyncadd %s164, %s171
          %s173 = sadd.s32 %s23, %s22
          %s174 = smul.addr %s173, 16
          %s175 = scalar_lea.hbm %s1, %s174
          %s177 = sshll.u32 %s166, 4
          %s178 = int_to_ptr.vmem [resolvable:$true] %s177
          %180 = dma.vmem_to_hbm [thread:$0]  %s178, 16, %s175, %s164
        $region32: #{tpu_custom_call.1} parent=23 // pred_fallthru
          _
      $region24: #{tpu_custom_call.1} parent=5 // pred_fallthru
        _
      %p181 = scmp.le.s32.totalorder 2, %s13
      // Predicated region
      $region33: #{tpu_custom_call.1} parent=5 // pred_check
        %p182 = pneg %p181
      $region34: #{tpu_custom_call.1} parent=5 // pred_check_branch
        %184 = sbr.rel (%p182) target = $region36
      $region35: #{tpu_custom_call.1} parent=5 // pred_region
        %s185 = ssub.s32 %s13, 2
        // Predicated region
        $region37: #{tpu_custom_call.1} parent=35 // pred_check
          %p186 = pneg %p84
        $region38: #{tpu_custom_call.1} parent=35 // pred_check_branch
          %188 = sbr.rel (%p186) target = $region40
        $region39: #{tpu_custom_call.1} parent=35 // pred_region
          %s189 = sand.u32 %s69, 1
          %s190 = scalar_lea.sflag [#allocation4], %s189
          %s191 = sand.u32 %s69, 1
          %s192 = scalar_lea.vmem [#allocation5], %s191
          %193 = dma.done %s190, 16
        $region40: #{tpu_custom_call.1} parent=35 // pred_fallthru
          _
      $region36: #{tpu_custom_call.1} parent=5 // pred_fallthru
        _
    $region6: #{tpu_custom_call.1} parent=1 // loop_footer
      %s17 = sadd.s32 1, %s13
    $region7: #{tpu_custom_call.1} parent=1 // loop_footer_branch
      %12 = sbr.rel target = $region3
    $region8: #{tpu_custom_call.1} parent=1 // loop_exit
      _
    %194 = vsyncpa [#allocation3], 1
    %s195 = scalar_lea.sflag [#allocation3], 1
    %196 = vsyncpa %s195, 1
    %197 = vsyncpa [#allocation4], 1
    %s198 = scalar_lea.sflag [#allocation4], 1
    %199 = vsyncpa %s198, 1

</llo_original>
